<compile_context>
chip_gen: v7x
topology: tpu7x:2x2x1
jax: 0.10.0
libtpu: 0.0.40
codegen_flags: <defaults>
</compile_context>

<pallas_src>
import jax
import jax.numpy as jnp
from jax.experimental import pallas as pl
from jax.experimental.pallas import tpu as pltpu


def mlp_kernel(xT_ref, w1T_ref, b1_ref, w2T_ref, b2_ref, oT_ref):
    xT = xT_ref[...]                      # (in_f, TB)    in_f = 2, batch in lanes
    w1T = w1T_ref[...]                    # (hid_p, in_f) = (128, 2)

    # fc1 with K=2: rank-1 VPU updates, hT[j, b] = sum_k w1[k, j] * x[b, k].
    n_in = xT.shape[0]
    hT = w1T[:, 0:1] * xT[0:1, :]
    for k in range(1, n_in):              # trace-time unroll (n_in == 2)
        hT = hT + w1T[:, k:k + 1] * xT[k:k + 1, :]
    hT = jnp.maximum(hT + b1_ref[...], 0.0)           # (hid_p, TB), ReLU

    # fc2 on the MXU: (out_f, hid_p) @ (hid_p, TB).  K = 128 is one aligned
    # contraction tile; result lands directly in the lane-dense output layout.
    logitsT = jnp.dot(w2T_ref[...], hT,
                      preferred_element_type=jnp.float32,
                      precision=jax.lax.Precision.HIGHEST) + b2_ref[...]  # (out_f, TB)

    # log_softmax over the out_f = 3 rows, unrolled; each slice is a
    # lane-dense (1, TB) row, so exp/log/max run on full vregs.
    n_out = logitsT.shape[0]
    rows = [logitsT[j:j + 1, :] for j in range(n_out)]
    m = rows[0]
    for r in rows[1:]:
        m = jnp.maximum(m, r)
    s = jnp.exp(rows[0] - m)
    for r in rows[1:]:
        s = s + jnp.exp(r - m)
    lse = m + jnp.log(s)                               # (1, TB)
    oT_ref[...] = (logitsT - lse).astype(oT_ref.dtype)


def _round_up(n, m):
    return ((n + m - 1) // m) * m


def nn_forward(x, w1, b1, w2, b2, *, block_b=2048):
    """log_softmax(ReLU(x @ w1 + b1) @ w2 + b2, axis=1).

    Weights stored (in, out); biases stored (1, out).  Handles arbitrary batch
    sizes by padding to a lane-aligned batch tile and slicing the result.
    """
    B, in_f = x.shape
    hid = w1.shape[1]
    out_f = w2.shape[1]

    # Lane-align the hidden dim (100 -> 128).  Zero padding is exact (see top).
    hid_p = _round_up(max(hid, 128), 128)

    # Batch-in-lanes layout for the parameters (all VMEM-resident).
    w1T = jnp.pad(w1.T, ((0, hid_p - hid), (0, 0)))                    # (hid_p, in_f)
    b1T = jnp.pad(b1.reshape(hid, 1), ((0, hid_p - hid), (0, 0)))      # (hid_p, 1)
    w2T = jnp.pad(w2.T, ((0, 0), (0, hid_p - hid)))                    # (out_f, hid_p)
    b2T = b2.reshape(out_f, 1)                                         # (out_f, 1)

    # Batch tile: multiple of 128 lanes; small batches run in a single step.
    block_b = max(128, _round_up(block_b, 128))
    Bp = _round_up(B, 128)
    tb = min(block_b, Bp)
    Bp = _round_up(Bp, tb)
    xT = jnp.pad(x.T, ((0, 0), (0, Bp - B)))                           # (in_f, Bp)

    cost = pl.CostEstimate(
        flops=2 * B * hid_p * (in_f + out_f),
        transcendentals=(out_f + 1) * B,
        bytes_accessed=4 * (B * (in_f + out_f)
                            + hid_p * (in_f + out_f + 1) + out_f),
    )

    outT = pl.pallas_call(
        mlp_kernel,
        out_shape=jax.ShapeDtypeStruct((out_f, Bp), jnp.float32),
        grid=(Bp // tb,),
        in_specs=[
            pl.BlockSpec((in_f, tb), lambda i: (0, i)),       # xT: batch-tiled, lane-dense
            pl.BlockSpec((hid_p, in_f), lambda i: (0, 0)),    # w1T: VMEM-resident
            pl.BlockSpec((hid_p, 1), lambda i: (0, 0)),       # b1
            pl.BlockSpec((out_f, hid_p), lambda i: (0, 0)),   # w2T
            pl.BlockSpec((out_f, 1), lambda i: (0, 0)),       # b2
        ],
        out_specs=pl.BlockSpec((out_f, tb), lambda i: (0, i)),  # lane-dense output
        compiler_params=pltpu.CompilerParams(
            dimension_semantics=("parallel",)),               # v7x: both TCs share batch
        cost_estimate=cost,
    )(xT, w1T, b1T, w2T, b2T)

    # Back to the module's (B, out_f) layout.
    return outT[:, :B].T


def init_params(key):
    # Deterministic init mimicking nn.Linear's uniform(-1/sqrt(fan_in), ...).
    k1, k2, k3, k4 = jax.random.split(key, 4)
    in1, hid, out = 2, 100, 3
    bound1 = 1.0 / jnp.sqrt(in1)
    bound2 = 1.0 / jnp.sqrt(hid)
    w1 = jax.random.uniform(k1, (in1, hid), jnp.float32, -bound1, bound1)
    b1 = jax.random.uniform(k2, (1, hid), jnp.float32, -bound1, bound1)
    w2 = jax.random.uniform(k3, (hid, out), jnp.float32, -bound2, bound2)
    b2 = jax.random.uniform(k4, (1, out), jnp.float32, -bound2, bound2)
    return w1, b1, w2, b2


if __name__ == "__main__":
    key = jax.random.PRNGKey(0)
    pkey, xkey = jax.random.split(key)
    w1, b1, w2, b2 = init_params(pkey)

    def ref_forward(xx):
        h = jnp.maximum(xx @ w1 + b1, 0.0)
        return jax.nn.log_softmax(h @ w2 + b2, axis=1)

    # Non-multiple-of-128 batch: exercises padding (200 -> 256, single grid step).
    B = 200
    x = jax.random.normal(xkey, (B, 2), jnp.float32)
    out = nn_forward(x, w1, b1, w2, b2)
    jax.block_until_ready(out)
    assert out.shape == (B, 3)
    assert jnp.allclose(out, ref_forward(x), atol=1e-5), "mismatch vs reference"

    # Larger batch with a small tile: exercises a multi-step "parallel" grid.
    x2 = jax.random.normal(jax.random.PRNGKey(1), (1000, 2), jnp.float32)
    out2 = nn_forward(x2, w1, b1, w2, b2, block_b=256)
    jax.block_until_ready(out2)
    assert out2.shape == (1000, 3)
    assert jnp.allclose(out2, ref_forward(x2), atol=1e-5), "mismatch vs reference"

    print("KERNEL_OK")
</pallas_src>

<mosaic_0001>
module attributes {stable_mosaic.version = 11 : i64} {
  func.func @mlp_kernel(%arg0: i32, %arg1: memref<2x256xf32, #tpu.memory_space<vmem>>, %arg2: memref<128x2xf32, #tpu.memory_space<vmem>>, %arg3: memref<128x1xf32, #tpu.memory_space<vmem>>, %arg4: memref<3x128xf32, #tpu.memory_space<vmem>>, %arg5: memref<3x1xf32, #tpu.memory_space<vmem>>, %arg6: memref<3x256xf32, #tpu.memory_space<vmem>>) attributes {dimension_semantics = [#tpu.dimension_semantics<parallel>], iteration_bounds = array<i64: 1>, scalar_prefetch = 0 : i64, scratch_operands = 0 : i64, tpu.core_type = #tpu.core_type<tc>, window_params = [{transform_indices = @transform_0, window_bounds = array<i64: 2, 256>}, {pipeline_mode = #tpu.pipeline_mode<synchronous>, transform_indices = @transform_1, window_bounds = array<i64: 128, 2>}, {pipeline_mode = #tpu.pipeline_mode<synchronous>, transform_indices = @transform_2, window_bounds = array<i64: 128, 1>}, {pipeline_mode = #tpu.pipeline_mode<synchronous>, transform_indices = @transform_3, window_bounds = array<i64: 3, 128>}, {pipeline_mode = #tpu.pipeline_mode<synchronous>, transform_indices = @transform_4, window_bounds = array<i64: 3, 1>}, {transform_indices = @transform_5, window_bounds = array<i64: 3, 256>}]} {
    %c0 = arith.constant 0 : index
    %c0_0 = arith.constant 0 : index
    %0 = vector.load %arg1[%c0, %c0_0] : memref<2x256xf32, #tpu.memory_space<vmem>>, vector<2x256xf32>
    %c0_1 = arith.constant 0 : index
    %c0_2 = arith.constant 0 : index
    %1 = vector.load %arg2[%c0_1, %c0_2] : memref<128x2xf32, #tpu.memory_space<vmem>>, vector<128x2xf32>
    %2 = vector.extract_strided_slice %1 {offsets = [0, 0], sizes = [128, 1], strides = [1, 1]} : vector<128x2xf32> to vector<128x1xf32>
    %3 = vector.extract_strided_slice %0 {offsets = [0, 0], sizes = [1, 256], strides = [1, 1]} : vector<2x256xf32> to vector<1x256xf32>
    %4 = vector.broadcast %2 : vector<128x1xf32> to vector<128x256xf32>
    %5 = vector.broadcast %3 : vector<1x256xf32> to vector<128x256xf32>
    %6 = arith.mulf %4, %5 : vector<128x256xf32>
    %7 = vector.extract_strided_slice %1 {offsets = [0, 1], sizes = [128, 1], strides = [1, 1]} : vector<128x2xf32> to vector<128x1xf32>
    %8 = vector.extract_strided_slice %0 {offsets = [1, 0], sizes = [1, 256], strides = [1, 1]} : vector<2x256xf32> to vector<1x256xf32>
    %9 = vector.broadcast %7 : vector<128x1xf32> to vector<128x256xf32>
    %10 = vector.broadcast %8 : vector<1x256xf32> to vector<128x256xf32>
    %11 = arith.mulf %9, %10 : vector<128x256xf32>
    %12 = arith.addf %6, %11 : vector<128x256xf32>
    %c0_3 = arith.constant 0 : index
    %c0_4 = arith.constant 0 : index
    %13 = vector.load %arg3[%c0_3, %c0_4] : memref<128x1xf32, #tpu.memory_space<vmem>>, vector<128x1xf32>
    %14 = vector.broadcast %13 : vector<128x1xf32> to vector<128x256xf32>
    %15 = arith.addf %12, %14 : vector<128x256xf32>
    %cst = arith.constant 0.000000e+00 : f32
    %16 = vector.broadcast %cst : f32 to vector<128x256xf32>
    %17 = arith.maximumf %15, %16 : vector<128x256xf32>
    %c0_5 = arith.constant 0 : index
    %c0_6 = arith.constant 0 : index
    %18 = vector.load %arg4[%c0_5, %c0_6] : memref<3x128xf32, #tpu.memory_space<vmem>>, vector<3x128xf32>
    %cst_7 = arith.constant dense<0.000000e+00> : vector<3x256xf32>
    %19 = tpu.matmul %18, %17, %cst_7 {dimension_numbers = #tpu.dot_dimension_numbers<[1], [0], [0], [1], [0, 0, 1, 1], [], []>, precision = #tpu.contract_precision<fp32>} : vector<3x128xf32>, vector<128x256xf32>, vector<3x256xf32> -> vector<3x256xf32>
    %c0_8 = arith.constant 0 : index
    %c0_9 = arith.constant 0 : index
    %20 = vector.load %arg5[%c0_8, %c0_9] : memref<3x1xf32, #tpu.memory_space<vmem>>, vector<3x1xf32>
    %21 = vector.broadcast %20 : vector<3x1xf32> to vector<3x256xf32>
    %22 = arith.addf %19, %21 : vector<3x256xf32>
    %23 = vector.extract_strided_slice %22 {offsets = [0, 0], sizes = [1, 256], strides = [1, 1]} : vector<3x256xf32> to vector<1x256xf32>
    %24 = vector.extract_strided_slice %22 {offsets = [1, 0], sizes = [1, 256], strides = [1, 1]} : vector<3x256xf32> to vector<1x256xf32>
    %25 = vector.extract_strided_slice %22 {offsets = [2, 0], sizes = [1, 256], strides = [1, 1]} : vector<3x256xf32> to vector<1x256xf32>
    %26 = arith.maximumf %23, %24 : vector<1x256xf32>
    %27 = arith.maximumf %26, %25 : vector<1x256xf32>
    %28 = arith.subf %23, %27 : vector<1x256xf32>
    %29 = math.exp %28 : vector<1x256xf32>
    %30 = arith.subf %24, %27 : vector<1x256xf32>
    %31 = math.exp %30 : vector<1x256xf32>
    %32 = arith.addf %29, %31 : vector<1x256xf32>
    %33 = arith.subf %25, %27 : vector<1x256xf32>
    %34 = math.exp %33 : vector<1x256xf32>
    %35 = arith.addf %32, %34 : vector<1x256xf32>
    %36 = math.log %35 : vector<1x256xf32>
    %37 = arith.addf %27, %36 : vector<1x256xf32>
    %38 = vector.broadcast %37 : vector<1x256xf32> to vector<3x256xf32>
    %39 = arith.subf %22, %38 : vector<3x256xf32>
    %c0_10 = arith.constant 0 : index
    %c0_11 = arith.constant 0 : index
    %40 = vector.load %arg6[%c0_10, %c0_11] : memref<3x256xf32, #tpu.memory_space<vmem>>, vector<3x256xf32>
    tpu.vector_store %arg6[%c0_10, %c0_11], %39 {strides = array<i32>} : memref<3x256xf32, #tpu.memory_space<vmem>>, vector<3x256xf32>,
    return
  }
  func.func @transform_0(%arg0: i32) -> (i32, i32) {
    %c0_i32 = arith.constant 0 : i32
    %c0_i32_0 = arith.constant 0 : i32
    return %c0_i32, %arg0 : i32, i32
  }
  func.func @transform_1(%arg0: i32) -> (i32, i32) {
    %c0_i32 = arith.constant 0 : i32
    %c0_i32_0 = arith.constant 0 : i32
    %c0_i32_1 = arith.constant 0 : i32
    return %c0_i32, %c0_i32_0 : i32, i32
  }
  func.func @transform_2(%arg0: i32) -> (i32, i32) {
    %c0_i32 = arith.constant 0 : i32
    %c0_i32_0 = arith.constant 0 : i32
    %c0_i32_1 = arith.constant 0 : i32
    return %c0_i32, %c0_i32_0 : i32, i32
  }
  func.func @transform_3(%arg0: i32) -> (i32, i32) {
    %c0_i32 = arith.constant 0 : i32
    %c0_i32_0 = arith.constant 0 : i32
    %c0_i32_1 = arith.constant 0 : i32
    return %c0_i32, %c0_i32_0 : i32, i32
  }
  func.func @transform_4(%arg0: i32) -> (i32, i32) {
    %c0_i32 = arith.constant 0 : i32
    %c0_i32_0 = arith.constant 0 : i32
    %c0_i32_1 = arith.constant 0 : i32
    return %c0_i32, %c0_i32_0 : i32, i32
  }
  func.func @transform_5(%arg0: i32) -> (i32, i32) {
    %c0_i32 = arith.constant 0 : i32
    %c0_i32_0 = arith.constant 0 : i32
    return %c0_i32, %arg0 : i32, i32
  }
}

</mosaic_0001>

<llo_original>
// kernel: tpu_custom_call.1
$region0: #{tpu_custom_call.1}
  #allocation0 [shape = 'u32[]', space=smem, size = 0x4, offset = 0x4, fixed_abs, tag = 'smem constant byte address 0x4 - core index']
  #allocation1 [shape = 'u32[144,128]{1,0:T(1,128)}', space=vmem, size = 0x12000, scoped, tag = 'internal scratch']
  %s0 = inlined_call_operand.vmem [shape: f32[2,256], index: 0, kind: input, shape index: {}]
  %s1 = inlined_call_operand.vmem [shape: f32[128,2], index: 1, kind: input, shape index: {}]
  %s2 = inlined_call_operand.vmem [shape: f32[128,1], index: 2, kind: input, shape index: {}]
  %s3 = inlined_call_operand.vmem [shape: f32[3,128], index: 3, kind: input, shape index: {}]
  %s4 = inlined_call_operand.vmem [shape: f32[3,1], index: 4, kind: input, shape index: {}]
  %s5 = inlined_call_operand.hbm [shape: f32[3,256], index: 5, kind: output, shape index: {}]
  %s6 = sld [smem:[#allocation0]]
  $region30: #{tpu_custom_call.1} parent=0
    _
  %s8 = ssub.s32 1, %s6
  %s9 = scalar_select 0, %s8, %s6
  $region1: #{tpu_custom_call.1} parent=0
    #allocation2 [shape = 'u8[4096]{0}', space=vmem, size = 0x1000, scoped, tag = 'output window, operand 0, single buffered']
    #allocation3 [shape = 's32[1]{0}', space=sflag, size = 0x4, scoped, tag = 'scoped memory for tpu_custom_call.1']
    %10 = vsyncpa [#allocation3], 0
    // Predicated region
    $region2: #{tpu_custom_call.1} parent=1 // pred_check
      _
    $region3: #{tpu_custom_call.1} parent=1 // pred_check_branch
      %12 = sbr.rel (0) target = $region5
    $region4: #{tpu_custom_call.1} parent=1 // pred_region
      _
    $region5: #{tpu_custom_call.1} parent=1 // pred_fallthru
      _
    // Predicated region
    $region6: #{tpu_custom_call.1} parent=1 // pred_check
      _
    $region7: #{tpu_custom_call.1} parent=1 // pred_check_branch
      %14 = sbr.rel (0) target = $region9
    $region8: #{tpu_custom_call.1} parent=1 // pred_region
      _
    $region9: #{tpu_custom_call.1} parent=1 // pred_fallthru
      _
    // Predicated region
    $region10: #{tpu_custom_call.1} parent=1 // pred_check
      _
    $region11: #{tpu_custom_call.1} parent=1 // pred_check_branch
      %16 = sbr.rel (0) target = $region13
    $region12: #{tpu_custom_call.1} parent=1 // pred_region
      _
    $region13: #{tpu_custom_call.1} parent=1 // pred_fallthru
      _
    // Predicated region
    $region14: #{tpu_custom_call.1} parent=1 // pred_check
      _
    $region15: #{tpu_custom_call.1} parent=1 // pred_check_branch
      %18 = sbr.rel (0) target = $region17
    $region16: #{tpu_custom_call.1} parent=1 // pred_region
      _
    $region17: #{tpu_custom_call.1} parent=1 // pred_fallthru
      _
    // Predicated region
    $region18: #{tpu_custom_call.1} parent=1 // pred_check
      _
    $region19: #{tpu_custom_call.1} parent=1 // pred_check_branch
      %20 = sbr.rel (0) target = $region21
    $region20: #{tpu_custom_call.1} parent=1 // pred_region
      _
    $region21: #{tpu_custom_call.1} parent=1 // pred_fallthru
      _
    %v21 = vld [vmem:[%s0] sm:$0xf]
    %v22 = vld [vmem:[%s1] sm:$0xff]
    %v23 = vld [vmem:[%s1 + $0x8] sm:$0xff]
    %v24 = vld [vmem:[%s1 + $0x10] sm:$0xff]
    %v25 = vld [vmem:[%s1 + $0x18] sm:$0xff]
    %v26 = vld [vmem:[%s1 + $0x20] sm:$0xff]
    %v27 = vld [vmem:[%s1 + $0x28] sm:$0xff]
    %v28 = vld [vmem:[%s1 + $0x30] sm:$0xff]
    %v29 = vld [vmem:[%s1 + $0x38] sm:$0xff]
    %v30 = vld [vmem:[%s1 + $0x40] sm:$0xff]
    %v31 = vld [vmem:[%s1 + $0x48] sm:$0xff]
    %v32 = vld [vmem:[%s1 + $0x50] sm:$0xff]
    %v33 = vld [vmem:[%s1 + $0x58] sm:$0xff]
    %v34 = vld [vmem:[%s1 + $0x60] sm:$0xff]
    %v35 = vld [vmem:[%s1 + $0x68] sm:$0xff]
    %v36 = vld [vmem:[%s1 + $0x70] sm:$0xff]
    %v37 = vld [vmem:[%s1 + $0x78] sm:$0xff]
    %39 = vset.pattern.permute.xlu0 0
    %40 = vperm.xlu0 %39, %v22
    %v41 = vpop.permute.xlu0 %40
    %44 = vset.pattern.permute.xlu0 0
    %45 = vperm.xlu0 %44, %v23
    %v46 = vpop.permute.xlu0 %45
    %49 = vset.pattern.permute.xlu0 0
    %50 = vperm.xlu0 %49, %v24
    %v51 = vpop.permute.xlu0 %50
    %54 = vset.pattern.permute.xlu0 0
    %55 = vperm.xlu0 %54, %v25
    %v56 = vpop.permute.xlu0 %55
    %59 = vset.pattern.permute.xlu0 0
    %60 = vperm.xlu0 %59, %v26
    %v61 = vpop.permute.xlu0 %60
    %64 = vset.pattern.permute.xlu0 0
    %65 = vperm.xlu0 %64, %v27
    %v66 = vpop.permute.xlu0 %65
    %69 = vset.pattern.permute.xlu0 0
    %70 = vperm.xlu0 %69, %v28
    %v71 = vpop.permute.xlu0 %70
    %74 = vset.pattern.permute.xlu0 0
    %75 = vperm.xlu0 %74, %v29
    %v76 = vpop.permute.xlu0 %75
    %79 = vset.pattern.permute.xlu0 0
    %80 = vperm.xlu0 %79, %v30
    %v81 = vpop.permute.xlu0 %80
    %84 = vset.pattern.permute.xlu0 0
    %85 = vperm.xlu0 %84, %v31
    %v86 = vpop.permute.xlu0 %85
    %89 = vset.pattern.permute.xlu0 0
    %90 = vperm.xlu0 %89, %v32
    %v91 = vpop.permute.xlu0 %90
    %94 = vset.pattern.permute.xlu0 0
    %95 = vperm.xlu0 %94, %v33
    %v96 = vpop.permute.xlu0 %95
    %99 = vset.pattern.permute.xlu0 0
    %100 = vperm.xlu0 %99, %v34
    %v101 = vpop.permute.xlu0 %100
    %104 = vset.pattern.permute.xlu0 0
    %105 = vperm.xlu0 %104, %v35
    %v106 = vpop.permute.xlu0 %105
    %109 = vset.pattern.permute.xlu0 0
    %110 = vperm.xlu0 %109, %v36
    %v111 = vpop.permute.xlu0 %110
    %114 = vset.pattern.permute.xlu0 0
    %115 = vperm.xlu0 %114, %v37
    %v116 = vpop.permute.xlu0 %115
    %v119 = vlaneseq
    %v120 = vshrl.u32 %v119, 7
    %v121 = vsub.s32 0, %v120
    %v122 = vrot.slane %v21, %v121
    %v123 = vlaneseq
    %v124 = vshrl.u32 %v123, 7
    %v125 = vsub.s32 2, %v124
    %v126 = vrot.slane %v21, %v125
    %v129 = vlaneseq
    %v130 = vshrl.u32 %v129, 7
    %v131 = vsub.s32 0, %v130
    %v132 = vrot.slane %v122, %v131
    %v133 = vlaneseq
    %v134 = vshrl.u32 %v133, 7
    %v135 = vsub.s32 0, %v134
    %v136 = vrot.slane %v126, %v135
    %v137 = vmul.f32 %v41, %v132
    %v138 = vmul.f32 %v41, %v136
    %v139 = vmul.f32 %v46, %v132
    %v140 = vmul.f32 %v46, %v136
    %v141 = vmul.f32 %v51, %v132
    %v142 = vmul.f32 %v51, %v136
    %v143 = vmul.f32 %v56, %v132
    %v144 = vmul.f32 %v56, %v136
    %v145 = vmul.f32 %v61, %v132
    %v146 = vmul.f32 %v61, %v136
    %v147 = vmul.f32 %v66, %v132
    %v148 = vmul.f32 %v66, %v136
    %v149 = vmul.f32 %v71, %v132
    %v150 = vmul.f32 %v71, %v136
    %v151 = vmul.f32 %v76, %v132
    %v152 = vmul.f32 %v76, %v136
    %v153 = vmul.f32 %v81, %v132
    %v154 = vmul.f32 %v81, %v136
    %v155 = vmul.f32 %v86, %v132
    %v156 = vmul.f32 %v86, %v136
    %v157 = vmul.f32 %v91, %v132
    %v158 = vmul.f32 %v91, %v136
    %v159 = vmul.f32 %v96, %v132
    %v160 = vmul.f32 %v96, %v136
    %v161 = vmul.f32 %v101, %v132
    %v162 = vmul.f32 %v101, %v136
    %v163 = vmul.f32 %v106, %v132
    %v164 = vmul.f32 %v106, %v136
    %v165 = vmul.f32 %v111, %v132
    %v166 = vmul.f32 %v111, %v136
    %v167 = vmul.f32 %v116, %v132
    %v168 = vmul.f32 %v116, %v136
    %169 = vset.pattern.permute.xlu0 1
    %170 = vperm.xlu0 %169, %v22
    %v171 = vpop.permute.xlu0 %170
    %173 = vset.pattern.permute.xlu0 1
    %174 = vperm.xlu0 %173, %v23
    %v175 = vpop.permute.xlu0 %174
    %177 = vset.pattern.permute.xlu0 1
    %178 = vperm.xlu0 %177, %v24
    %v179 = vpop.permute.xlu0 %178
    %181 = vset.pattern.permute.xlu0 1
    %182 = vperm.xlu0 %181, %v25
    %v183 = vpop.permute.xlu0 %182
    %185 = vset.pattern.permute.xlu0 1
    %186 = vperm.xlu0 %185, %v26
    %v187 = vpop.permute.xlu0 %186
    %189 = vset.pattern.permute.xlu0 1
    %190 = vperm.xlu0 %189, %v27
    %v191 = vpop.permute.xlu0 %190
    %193 = vset.pattern.permute.xlu0 1
    %194 = vperm.xlu0 %193, %v28
    %v195 = vpop.permute.xlu0 %194
    %197 = vset.pattern.permute.xlu0 1
    %198 = vperm.xlu0 %197, %v29
    %v199 = vpop.permute.xlu0 %198
    %201 = vset.pattern.permute.xlu0 1
    %202 = vperm.xlu0 %201, %v30
    %v203 = vpop.permute.xlu0 %202
    %205 = vset.pattern.permute.xlu0 1
    %206 = vperm.xlu0 %205, %v31
    %v207 = vpop.permute.xlu0 %206
    %209 = vset.pattern.permute.xlu0 1
    %210 = vperm.xlu0 %209, %v32
    %v211 = vpop.permute.xlu0 %210
    %213 = vset.pattern.permute.xlu0 1
    %214 = vperm.xlu0 %213, %v33
    %v215 = vpop.permute.xlu0 %214
    %217 = vset.pattern.permute.xlu0 1
    %218 = vperm.xlu0 %217, %v34
    %v219 = vpop.permute.xlu0 %218
    %221 = vset.pattern.permute.xlu0 1
    %222 = vperm.xlu0 %221, %v35
    %v223 = vpop.permute.xlu0 %222
    %225 = vset.pattern.permute.xlu0 1
    %226 = vperm.xlu0 %225, %v36
    %v227 = vpop.permute.xlu0 %226
    %229 = vset.pattern.permute.xlu0 1
    %230 = vperm.xlu0 %229, %v37
    %v231 = vpop.permute.xlu0 %230
    %v233 = vlaneseq
    %v234 = vshrl.u32 %v233, 7
    %v235 = vsub.s32 1, %v234
    %v236 = vrot.slane %v21, %v235
    %v237 = vlaneseq
    %v238 = vshrl.u32 %v237, 7
    %v239 = vsub.s32 3, %v238
    %v240 = vrot.slane %v21, %v239
    %v243 = vlaneseq
    %v244 = vshrl.u32 %v243, 7
    %v245 = vsub.s32 1, %v244
    %v246 = vrot.slane %v236, %v245
    %v247 = vlaneseq
    %v248 = vshrl.u32 %v247, 7
    %v249 = vsub.s32 1, %v248
    %v250 = vrot.slane %v240, %v249
    %v251 = vmul.f32 %v171, %v246
    %v252 = vmul.f32 %v171, %v250
    %v253 = vmul.f32 %v175, %v246
    %v254 = vmul.f32 %v175, %v250
    %v255 = vmul.f32 %v179, %v246
    %v256 = vmul.f32 %v179, %v250
    %v257 = vmul.f32 %v183, %v246
    %v258 = vmul.f32 %v183, %v250
    %v259 = vmul.f32 %v187, %v246
    %v260 = vmul.f32 %v187, %v250
    %v261 = vmul.f32 %v191, %v246
    %v262 = vmul.f32 %v191, %v250
    %v263 = vmul.f32 %v195, %v246
    %v264 = vmul.f32 %v195, %v250
    %v265 = vmul.f32 %v199, %v246
    %v266 = vmul.f32 %v199, %v250
    %v267 = vmul.f32 %v203, %v246
    %v268 = vmul.f32 %v203, %v250
    %v269 = vmul.f32 %v207, %v246
    %v270 = vmul.f32 %v207, %v250
    %v271 = vmul.f32 %v211, %v246
    %v272 = vmul.f32 %v211, %v250
    %v273 = vmul.f32 %v215, %v246
    %v274 = vmul.f32 %v215, %v250
    %v275 = vmul.f32 %v219, %v246
    %v276 = vmul.f32 %v219, %v250
    %v277 = vmul.f32 %v223, %v246
    %v278 = vmul.f32 %v223, %v250
    %v279 = vmul.f32 %v227, %v246
    %v280 = vmul.f32 %v227, %v250
    %v281 = vmul.f32 %v231, %v246
    %v282 = vmul.f32 %v231, %v250
    %v283 = vadd.f32 %v137, %v251
    %v284 = vadd.f32 %v138, %v252
    %v285 = vadd.f32 %v139, %v253
    %v286 = vadd.f32 %v140, %v254
    %v287 = vadd.f32 %v141, %v255
    %v288 = vadd.f32 %v142, %v256
    %v289 = vadd.f32 %v143, %v257
    %v290 = vadd.f32 %v144, %v258
    %v291 = vadd.f32 %v145, %v259
    %v292 = vadd.f32 %v146, %v260
    %v293 = vadd.f32 %v147, %v261
    %v294 = vadd.f32 %v148, %v262
    %v295 = vadd.f32 %v149, %v263
    %v296 = vadd.f32 %v150, %v264
    %v297 = vadd.f32 %v151, %v265
    %v298 = vadd.f32 %v152, %v266
    %v299 = vadd.f32 %v153, %v267
    %v300 = vadd.f32 %v154, %v268
    %v301 = vadd.f32 %v155, %v269
    %v302 = vadd.f32 %v156, %v270
    %v303 = vadd.f32 %v157, %v271
    %v304 = vadd.f32 %v158, %v272
    %v305 = vadd.f32 %v159, %v273
    %v306 = vadd.f32 %v160, %v274
    %v307 = vadd.f32 %v161, %v275
    %v308 = vadd.f32 %v162, %v276
    %v309 = vadd.f32 %v163, %v277
    %v310 = vadd.f32 %v164, %v278
    %v311 = vadd.f32 %v165, %v279
    %v312 = vadd.f32 %v166, %v280
    %v313 = vadd.f32 %v167, %v281
    %v314 = vadd.f32 %v168, %v282
    %v315 = vld [vmem:[%s2] sm:$0xff]
    %v316 = vld [vmem:[%s2 + $0x8] sm:$0xff]
    %v317 = vld [vmem:[%s2 + $0x10] sm:$0xff]
    %v318 = vld [vmem:[%s2 + $0x18] sm:$0xff]
    %v319 = vld [vmem:[%s2 + $0x20] sm:$0xff]
    %v320 = vld [vmem:[%s2 + $0x28] sm:$0xff]
    %v321 = vld [vmem:[%s2 + $0x30] sm:$0xff]
    %v322 = vld [vmem:[%s2 + $0x38] sm:$0xff]
    %v323 = vld [vmem:[%s2 + $0x40] sm:$0xff]
    %v324 = vld [vmem:[%s2 + $0x48] sm:$0xff]
    %v325 = vld [vmem:[%s2 + $0x50] sm:$0xff]
    %v326 = vld [vmem:[%s2 + $0x58] sm:$0xff]
    %v327 = vld [vmem:[%s2 + $0x60] sm:$0xff]
    %v328 = vld [vmem:[%s2 + $0x68] sm:$0xff]
    %v329 = vld [vmem:[%s2 + $0x70] sm:$0xff]
    %v330 = vld [vmem:[%s2 + $0x78] sm:$0xff]
    %332 = vset.pattern.permute.xlu0 0
    %333 = vperm.xlu0 %332, %v315
    %v334 = vpop.permute.xlu0 %333
    %337 = vset.pattern.permute.xlu0 0
    %338 = vperm.xlu0 %337, %v316
    %v339 = vpop.permute.xlu0 %338
    %342 = vset.pattern.permute.xlu0 0
    %343 = vperm.xlu0 %342, %v317
    %v344 = vpop.permute.xlu0 %343
    %347 = vset.pattern.permute.xlu0 0
    %348 = vperm.xlu0 %347, %v318
    %v349 = vpop.permute.xlu0 %348
    %352 = vset.pattern.permute.xlu0 0
    %353 = vperm.xlu0 %352, %v319
    %v354 = vpop.permute.xlu0 %353
    %357 = vset.pattern.permute.xlu0 0
    %358 = vperm.xlu0 %357, %v320
    %v359 = vpop.permute.xlu0 %358
    %362 = vset.pattern.permute.xlu0 0
    %363 = vperm.xlu0 %362, %v321
    %v364 = vpop.permute.xlu0 %363
    %367 = vset.pattern.permute.xlu0 0
    %368 = vperm.xlu0 %367, %v322
    %v369 = vpop.permute.xlu0 %368
    %372 = vset.pattern.permute.xlu0 0
    %373 = vperm.xlu0 %372, %v323
    %v374 = vpop.permute.xlu0 %373
    %377 = vset.pattern.permute.xlu0 0
    %378 = vperm.xlu0 %377, %v324
    %v379 = vpop.permute.xlu0 %378
    %382 = vset.pattern.permute.xlu0 0
    %383 = vperm.xlu0 %382, %v325
    %v384 = vpop.permute.xlu0 %383
    %387 = vset.pattern.permute.xlu0 0
    %388 = vperm.xlu0 %387, %v326
    %v389 = vpop.permute.xlu0 %388
    %392 = vset.pattern.permute.xlu0 0
    %393 = vperm.xlu0 %392, %v327
    %v394 = vpop.permute.xlu0 %393
    %397 = vset.pattern.permute.xlu0 0
    %398 = vperm.xlu0 %397, %v328
    %v399 = vpop.permute.xlu0 %398
    %402 = vset.pattern.permute.xlu0 0
    %403 = vperm.xlu0 %402, %v329
    %v404 = vpop.permute.xlu0 %403
    %407 = vset.pattern.permute.xlu0 0
    %408 = vperm.xlu0 %407, %v330
    %v409 = vpop.permute.xlu0 %408
    %v411 = vadd.f32 %v283, %v334
    %v412 = vadd.f32 %v284, %v334
    %v413 = vadd.f32 %v285, %v339
    %v414 = vadd.f32 %v286, %v339
    %v415 = vadd.f32 %v287, %v344
    %v416 = vadd.f32 %v288, %v344
    %v417 = vadd.f32 %v289, %v349
    %v418 = vadd.f32 %v290, %v349
    %v419 = vadd.f32 %v291, %v354
    %v420 = vadd.f32 %v292, %v354
    %v421 = vadd.f32 %v293, %v359
    %v422 = vadd.f32 %v294, %v359
    %v423 = vadd.f32 %v295, %v364
    %v424 = vadd.f32 %v296, %v364
    %v425 = vadd.f32 %v297, %v369
    %v426 = vadd.f32 %v298, %v369
    %v427 = vadd.f32 %v299, %v374
    %v428 = vadd.f32 %v300, %v374
    %v429 = vadd.f32 %v301, %v379
    %v430 = vadd.f32 %v302, %v379
    %v431 = vadd.f32 %v303, %v384
    %v432 = vadd.f32 %v304, %v384
    %v433 = vadd.f32 %v305, %v389
    %v434 = vadd.f32 %v306, %v389
    %v435 = vadd.f32 %v307, %v394
    %v436 = vadd.f32 %v308, %v394
    %v437 = vadd.f32 %v309, %v399
    %v438 = vadd.f32 %v310, %v399
    %v439 = vadd.f32 %v311, %v404
    %v440 = vadd.f32 %v312, %v404
    %v441 = vadd.f32 %v313, %v409
    %v442 = vadd.f32 %v314, %v409
    %v443 = vmax.f32 %v411, 0.0
    %v444 = vmax.f32 %v412, 0.0
    %v445 = vmax.f32 %v413, 0.0
    %v446 = vmax.f32 %v414, 0.0
    %v447 = vmax.f32 %v415, 0.0
    %v448 = vmax.f32 %v416, 0.0
    %v449 = vmax.f32 %v417, 0.0
    %v450 = vmax.f32 %v418, 0.0
    %v451 = vmax.f32 %v419, 0.0
    %v452 = vmax.f32 %v420, 0.0
    %v453 = vmax.f32 %v421, 0.0
    %v454 = vmax.f32 %v422, 0.0
    %v455 = vmax.f32 %v423, 0.0
    %v456 = vmax.f32 %v424, 0.0
    %v457 = vmax.f32 %v425, 0.0
    %v458 = vmax.f32 %v426, 0.0
    %v459 = vmax.f32 %v427, 0.0
    %v460 = vmax.f32 %v428, 0.0
    %v461 = vmax.f32 %v429, 0.0
    %v462 = vmax.f32 %v430, 0.0
    %v463 = vmax.f32 %v431, 0.0
    %v464 = vmax.f32 %v432, 0.0
    %v465 = vmax.f32 %v433, 0.0
    %v466 = vmax.f32 %v434, 0.0
    %v467 = vmax.f32 %v435, 0.0
    %v468 = vmax.f32 %v436, 0.0
    %v469 = vmax.f32 %v437, 0.0
    %v470 = vmax.f32 %v438, 0.0
    %v471 = vmax.f32 %v439, 0.0
    %v472 = vmax.f32 %v440, 0.0
    %v473 = vmax.f32 %v441, 0.0
    %v474 = vmax.f32 %v442, 0.0
    %v475 = vld [vmem:[%s3] sm:$0x7]
    %v476 = vld [vmem:[%s4] sm:$0x7]
    %478 = vset.pattern.permute.xlu0 0
    %479 = vperm.xlu0 %478, %v476
    %v480 = vpop.permute.xlu0 %479
    %v482 = vand.u32 %v444, 4294901760
    %483 = vmatprep.subr.mxu0 %v482
    %v484 = vand.u32 %v443, 4294901760
    %485 = vmatpush1.msra.mxu0 %v484
    %v486 = vand.u32 %v446, 4294901760
    %487 = vmatprep.subr.mxu0 %v486
    %v488 = vand.u32 %v445, 4294901760
    %489 = vmatpush1.msra.mxu0 %v488
    %v490 = vand.u32 %v448, 4294901760
    %491 = vmatprep.subr.mxu0 %v490
    %v492 = vand.u32 %v447, 4294901760
    %493 = vmatpush1.msra.mxu0 %v492
    %v494 = vand.u32 %v450, 4294901760
    %495 = vmatprep.subr.mxu0 %v494
    %v496 = vand.u32 %v449, 4294901760
    %497 = vmatpush1.msra.mxu0 %v496
    %v498 = vand.u32 %v452, 4294901760
    %499 = vmatprep.subr.mxu0 %v498
    %v500 = vand.u32 %v451, 4294901760
    %501 = vmatpush1.msra.mxu0 %v500
    %v502 = vand.u32 %v454, 4294901760
    %503 = vmatprep.subr.mxu0 %v502
    %v504 = vand.u32 %v453, 4294901760
    %505 = vmatpush1.msra.mxu0 %v504
    %v506 = vand.u32 %v456, 4294901760
    %507 = vmatprep.subr.mxu0 %v506
    %v508 = vand.u32 %v455, 4294901760
    %509 = vmatpush1.msra.mxu0 %v508
    %v510 = vand.u32 %v458, 4294901760
    %511 = vmatprep.subr.mxu0 %v510
    %v512 = vand.u32 %v457, 4294901760
    %513 = vmatpush1.msra.mxu0 %v512
    %v514 = vand.u32 %v460, 4294901760
    %515 = vmatprep.subr.mxu0 %v514
    %v516 = vand.u32 %v459, 4294901760
    %517 = vmatpush1.msra.mxu0 %v516
    %v518 = vand.u32 %v462, 4294901760
    %519 = vmatprep.subr.mxu0 %v518
    %v520 = vand.u32 %v461, 4294901760
    %521 = vmatpush1.msra.mxu0 %v520
    %v522 = vand.u32 %v464, 4294901760
    %523 = vmatprep.subr.mxu0 %v522
    %v524 = vand.u32 %v463, 4294901760
    %525 = vmatpush1.msra.mxu0 %v524
    %v526 = vand.u32 %v466, 4294901760
    %527 = vmatprep.subr.mxu0 %v526
    %v528 = vand.u32 %v465, 4294901760
    %529 = vmatpush1.msra.mxu0 %v528
    %v530 = vand.u32 %v468, 4294901760
    %531 = vmatprep.subr.mxu0 %v530
    %v532 = vand.u32 %v467, 4294901760
    %533 = vmatpush1.msra.mxu0 %v532
    %v534 = vand.u32 %v470, 4294901760
    %535 = vmatprep.subr.mxu0 %v534
    %v536 = vand.u32 %v469, 4294901760
    %537 = vmatpush1.msra.mxu0 %v536
    %v538 = vand.u32 %v472, 4294901760
    %539 = vmatprep.subr.mxu0 %v538
    %v540 = vand.u32 %v471, 4294901760
    %541 = vmatpush1.msra.mxu0 %v540
    %v542 = vand.u32 %v474, 4294901760
    %543 = vmatprep.subr.mxu0 %v542
    %v544 = vand.u32 %v473, 4294901760
    %545 = vmatpush1.msra.mxu0 %v544
    %546 = vmatprep.subr.mxu0 0.0
    %547 = vmatpush1.msra.mxu0 0.0
    %548 = vmatprep.subr.mxu0 0.0
    %549 = vmatpush1.msra.mxu0 0.0
    %550 = vmatprep.subr.mxu0 0.0
    %551 = vmatpush1.msra.mxu0 0.0
    %552 = vmatprep.subr.mxu0 0.0
    %553 = vmatpush1.msra.mxu0 0.0
    %554 = vmatprep.subr.mxu0 0.0
    %555 = vmatpush1.msra.mxu0 0.0
    %556 = vmatprep.subr.mxu0 0.0
    %557 = vmatpush1.msra.mxu0 0.0
    %558 = vmatprep.subr.mxu0 0.0
    %559 = vmatpush1.msra.mxu0 0.0
    %560 = vmatprep.subr.mxu0 0.0
    %561 = vmatpush1.msra.mxu0 0.0
    %562 = vmatprep.subr.mxu0 0.0
    %563 = vmatpush1.msra.mxu0 0.0
    %564 = vmatprep.subr.mxu0 0.0
    %565 = vmatpush1.msra.mxu0 0.0
    %566 = vmatprep.subr.mxu0 0.0
    %567 = vmatpush1.msra.mxu0 0.0
    %568 = vmatprep.subr.mxu0 0.0
    %569 = vmatpush1.msra.mxu0 0.0
    %570 = vmatprep.subr.mxu0 0.0
    %571 = vmatpush1.msra.mxu0 0.0
    %572 = vmatprep.subr.mxu0 0.0
    %573 = vmatpush1.msra.mxu0 0.0
    %574 = vmatprep.subr.mxu0 0.0
    %575 = vmatpush1.msra.mxu0 0.0
    %576 = vmatprep.subr.mxu0 0.0
    %577 = vmatpush1.msra.mxu0 0.0
    %578 = vmatprep.mubr.f32.mxu0 0.0
    %v579 = vand.u32 %v475, 4294901760
    %v580 = vsub.f32 %v475, %v579
    %v581 = vand.u32 %v580, 4294901760
    %v582 = vsub.f32 %v580, %v581
    %v583 = vand.u32 %v582, 4294901760
    %584 = vmatmul.mubr.f32.gmra.mrb[0].mxu0 %v583
    %v585 = vpop.f32.mrb[0].mxu0
    %v586 = vadd.f32 %v480, %v585
    %v587 = vpop.f32.mrb[0].mxu0
    %v588 = vadd.f32 %v480, %v587
    %589 = vdwg.mxu0
    %v590 = vand.u32 %v444, 4294901760
    %v591 = vsub.f32 %v444, %v590
    %v592 = vand.u32 %v591, 4294901760
    %v593 = vsub.f32 %v591, %v592
    %v594 = vand.u32 %v593, 4294901760
    %595 = vmatprep.subr.mxu0 %v594
    %v596 = vand.u32 %v443, 4294901760
    %v597 = vsub.f32 %v443, %v596
    %v598 = vand.u32 %v597, 4294901760
    %v599 = vsub.f32 %v597, %v598
    %v600 = vand.u32 %v599, 4294901760
    %601 = vmatpush1.msra.mxu0 %v600
    %v602 = vand.u32 %v446, 4294901760
    %v603 = vsub.f32 %v446, %v602
    %v604 = vand.u32 %v603, 4294901760
    %v605 = vsub.f32 %v603, %v604
    %v606 = vand.u32 %v605, 4294901760
    %607 = vmatprep.subr.mxu0 %v606
    %v608 = vand.u32 %v445, 4294901760
    %v609 = vsub.f32 %v445, %v608
    %v610 = vand.u32 %v609, 4294901760
    %v611 = vsub.f32 %v609, %v610
    %v612 = vand.u32 %v611, 4294901760
    %613 = vmatpush1.msra.mxu0 %v612
    %v614 = vand.u32 %v448, 4294901760
    %v615 = vsub.f32 %v448, %v614
    %v616 = vand.u32 %v615, 4294901760
    %v617 = vsub.f32 %v615, %v616
    %v618 = vand.u32 %v617, 4294901760
    %619 = vmatprep.subr.mxu0 %v618
    %v620 = vand.u32 %v447, 4294901760
    %v621 = vsub.f32 %v447, %v620
    %v622 = vand.u32 %v621, 4294901760
    %v623 = vsub.f32 %v621, %v622
    %v624 = vand.u32 %v623, 4294901760
    %625 = vmatpush1.msra.mxu0 %v624
    %v626 = vand.u32 %v450, 4294901760
    %v627 = vsub.f32 %v450, %v626
    %v628 = vand.u32 %v627, 4294901760
    %v629 = vsub.f32 %v627, %v628
    %v630 = vand.u32 %v629, 4294901760
    %631 = vmatprep.subr.mxu0 %v630
    %v632 = vand.u32 %v449, 4294901760
    %v633 = vsub.f32 %v449, %v632
    %v634 = vand.u32 %v633, 4294901760
    %v635 = vsub.f32 %v633, %v634
    %v636 = vand.u32 %v635, 4294901760
    %637 = vmatpush1.msra.mxu0 %v636
    %v638 = vand.u32 %v452, 4294901760
    %v639 = vsub.f32 %v452, %v638
    %v640 = vand.u32 %v639, 4294901760
    %v641 = vsub.f32 %v639, %v640
    %v642 = vand.u32 %v641, 4294901760
    %643 = vmatprep.subr.mxu0 %v642
    %v644 = vand.u32 %v451, 4294901760
    %v645 = vsub.f32 %v451, %v644
    %v646 = vand.u32 %v645, 4294901760
    %v647 = vsub.f32 %v645, %v646
    %v648 = vand.u32 %v647, 4294901760
    %649 = vmatpush1.msra.mxu0 %v648
    %v650 = vand.u32 %v454, 4294901760
    %v651 = vsub.f32 %v454, %v650
    %v652 = vand.u32 %v651, 4294901760
    %v653 = vsub.f32 %v651, %v652
    %v654 = vand.u32 %v653, 4294901760
    %655 = vmatprep.subr.mxu0 %v654
    %v656 = vand.u32 %v453, 4294901760
    %v657 = vsub.f32 %v453, %v656
    %v658 = vand.u32 %v657, 4294901760
    %v659 = vsub.f32 %v657, %v658
    %v660 = vand.u32 %v659, 4294901760
    %661 = vmatpush1.msra.mxu0 %v660
    %v662 = vand.u32 %v456, 4294901760
    %v663 = vsub.f32 %v456, %v662
    %v664 = vand.u32 %v663, 4294901760
    %v665 = vsub.f32 %v663, %v664
    %v666 = vand.u32 %v665, 4294901760
    %667 = vmatprep.subr.mxu0 %v666
    %v668 = vand.u32 %v455, 4294901760
    %v669 = vsub.f32 %v455, %v668
    %v670 = vand.u32 %v669, 4294901760
    %v671 = vsub.f32 %v669, %v670
    %v672 = vand.u32 %v671, 4294901760
    %673 = vmatpush1.msra.mxu0 %v672
    %v674 = vand.u32 %v458, 4294901760
    %v675 = vsub.f32 %v458, %v674
    %v676 = vand.u32 %v675, 4294901760
    %v677 = vsub.f32 %v675, %v676
    %v678 = vand.u32 %v677, 4294901760
    %679 = vmatprep.subr.mxu0 %v678
    %v680 = vand.u32 %v457, 4294901760
    %v681 = vsub.f32 %v457, %v680
    %v682 = vand.u32 %v681, 4294901760
    %v683 = vsub.f32 %v681, %v682
    %v684 = vand.u32 %v683, 4294901760
    %685 = vmatpush1.msra.mxu0 %v684
    %v686 = vand.u32 %v460, 4294901760
    %v687 = vsub.f32 %v460, %v686
    %v688 = vand.u32 %v687, 4294901760
    %v689 = vsub.f32 %v687, %v688
    %v690 = vand.u32 %v689, 4294901760
    %691 = vmatprep.subr.mxu0 %v690
    %v692 = vand.u32 %v459, 4294901760
    %v693 = vsub.f32 %v459, %v692
    %v694 = vand.u32 %v693, 4294901760
    %v695 = vsub.f32 %v693, %v694
    %v696 = vand.u32 %v695, 4294901760
    %697 = vmatpush1.msra.mxu0 %v696
    %v698 = vand.u32 %v462, 4294901760
    %v699 = vsub.f32 %v462, %v698
    %v700 = vand.u32 %v699, 4294901760
    %v701 = vsub.f32 %v699, %v700
    %v702 = vand.u32 %v701, 4294901760
    %703 = vmatprep.subr.mxu0 %v702
    %v704 = vand.u32 %v461, 4294901760
    %v705 = vsub.f32 %v461, %v704
    %v706 = vand.u32 %v705, 4294901760
    %v707 = vsub.f32 %v705, %v706
    %v708 = vand.u32 %v707, 4294901760
    %709 = vmatpush1.msra.mxu0 %v708
    %v710 = vand.u32 %v464, 4294901760
    %v711 = vsub.f32 %v464, %v710
    %v712 = vand.u32 %v711, 4294901760
    %v713 = vsub.f32 %v711, %v712
    %v714 = vand.u32 %v713, 4294901760
    %715 = vmatprep.subr.mxu0 %v714
    %v716 = vand.u32 %v463, 4294901760
    %v717 = vsub.f32 %v463, %v716
    %v718 = vand.u32 %v717, 4294901760
    %v719 = vsub.f32 %v717, %v718
    %v720 = vand.u32 %v719, 4294901760
    %721 = vmatpush1.msra.mxu0 %v720
    %v722 = vand.u32 %v466, 4294901760
    %v723 = vsub.f32 %v466, %v722
    %v724 = vand.u32 %v723, 4294901760
    %v725 = vsub.f32 %v723, %v724
    %v726 = vand.u32 %v725, 4294901760
    %727 = vmatprep.subr.mxu0 %v726
    %v728 = vand.u32 %v465, 4294901760
    %v729 = vsub.f32 %v465, %v728
    %v730 = vand.u32 %v729, 4294901760
    %v731 = vsub.f32 %v729, %v730
    %v732 = vand.u32 %v731, 4294901760
    %733 = vmatpush1.msra.mxu0 %v732
    %v734 = vand.u32 %v468, 4294901760
    %v735 = vsub.f32 %v468, %v734
    %v736 = vand.u32 %v735, 4294901760
    %v737 = vsub.f32 %v735, %v736
    %v738 = vand.u32 %v737, 4294901760
    %739 = vmatprep.subr.mxu0 %v738
    %v740 = vand.u32 %v467, 4294901760
    %v741 = vsub.f32 %v467, %v740
    %v742 = vand.u32 %v741, 4294901760
    %v743 = vsub.f32 %v741, %v742
    %v744 = vand.u32 %v743, 4294901760
    %745 = vmatpush1.msra.mxu0 %v744
    %v746 = vand.u32 %v470, 4294901760
    %v747 = vsub.f32 %v470, %v746
    %v748 = vand.u32 %v747, 4294901760
    %v749 = vsub.f32 %v747, %v748
    %v750 = vand.u32 %v749, 4294901760
    %751 = vmatprep.subr.mxu0 %v750
    %v752 = vand.u32 %v469, 4294901760
    %v753 = vsub.f32 %v469, %v752
    %v754 = vand.u32 %v753, 4294901760
    %v755 = vsub.f32 %v753, %v754
    %v756 = vand.u32 %v755, 4294901760
    %757 = vmatpush1.msra.mxu0 %v756
    %v758 = vand.u32 %v472, 4294901760
    %v759 = vsub.f32 %v472, %v758
    %v760 = vand.u32 %v759, 4294901760
    %v761 = vsub.f32 %v759, %v760
    %v762 = vand.u32 %v761, 4294901760
    %763 = vmatprep.subr.mxu0 %v762
    %v764 = vand.u32 %v471, 4294901760
    %v765 = vsub.f32 %v471, %v764
    %v766 = vand.u32 %v765, 4294901760
    %v767 = vsub.f32 %v765, %v766
    %v768 = vand.u32 %v767, 4294901760
    %769 = vmatpush1.msra.mxu0 %v768
    %v770 = vand.u32 %v474, 4294901760
    %v771 = vsub.f32 %v474, %v770
    %v772 = vand.u32 %v771, 4294901760
    %v773 = vsub.f32 %v771, %v772
    %v774 = vand.u32 %v773, 4294901760
    %775 = vmatprep.subr.mxu0 %v774
    %v776 = vand.u32 %v473, 4294901760
    %v777 = vsub.f32 %v473, %v776
    %v778 = vand.u32 %v777, 4294901760
    %v779 = vsub.f32 %v777, %v778
    %v780 = vand.u32 %v779, 4294901760
    %781 = vmatpush1.msra.mxu0 %v780
    %782 = vmatprep.subr.mxu0 0.0
    %783 = vmatpush1.msra.mxu0 0.0
    %784 = vmatprep.subr.mxu0 0.0
    %785 = vmatpush1.msra.mxu0 0.0
    %786 = vmatprep.subr.mxu0 0.0
    %787 = vmatpush1.msra.mxu0 0.0
    %788 = vmatprep.subr.mxu0 0.0
    %789 = vmatpush1.msra.mxu0 0.0
    %790 = vmatprep.subr.mxu0 0.0
    %791 = vmatpush1.msra.mxu0 0.0
    %792 = vmatprep.subr.mxu0 0.0
    %793 = vmatpush1.msra.mxu0 0.0
    %794 = vmatprep.subr.mxu0 0.0
    %795 = vmatpush1.msra.mxu0 0.0
    %796 = vmatprep.subr.mxu0 0.0
    %797 = vmatpush1.msra.mxu0 0.0
    %798 = vmatprep.subr.mxu0 0.0
    %799 = vmatpush1.msra.mxu0 0.0
    %800 = vmatprep.subr.mxu0 0.0
    %801 = vmatpush1.msra.mxu0 0.0
    %802 = vmatprep.subr.mxu0 0.0
    %803 = vmatpush1.msra.mxu0 0.0
    %804 = vmatprep.subr.mxu0 0.0
    %805 = vmatpush1.msra.mxu0 0.0
    %806 = vmatprep.subr.mxu0 0.0
    %807 = vmatpush1.msra.mxu0 0.0
    %808 = vmatprep.subr.mxu0 0.0
    %809 = vmatpush1.msra.mxu0 0.0
    %810 = vmatprep.subr.mxu0 0.0
    %811 = vmatpush1.msra.mxu0 0.0
    %812 = vmatprep.subr.mxu0 0.0
    %813 = vmatpush1.msra.mxu0 0.0
    %814 = vmatprep.mubr.f32.mxu0 0.0
    %v815 = vand.u32 %v475, 4294901760
    %816 = vmatmul.mubr.f32.gmra.mrb[0].mxu0 %v815
    %v817 = vpop.f32.mrb[0].mxu0
    %v818 = vadd.f32 %v586, %v817
    %v819 = vpop.f32.mrb[0].mxu0
    %v820 = vadd.f32 %v588, %v819
    %821 = vdwg.mxu0
    %v822 = vand.u32 %v444, 4294901760
    %v823 = vsub.f32 %v444, %v822
    %824 = vmatprep.subr.mxu0 %v823
    %v825 = vand.u32 %v443, 4294901760
    %v826 = vsub.f32 %v443, %v825
    %827 = vmatpush1.msra.mxu0 %v826
    %v828 = vand.u32 %v446, 4294901760
    %v829 = vsub.f32 %v446, %v828
    %830 = vmatprep.subr.mxu0 %v829
    %v831 = vand.u32 %v445, 4294901760
    %v832 = vsub.f32 %v445, %v831
    %833 = vmatpush1.msra.mxu0 %v832
    %v834 = vand.u32 %v448, 4294901760
    %v835 = vsub.f32 %v448, %v834
    %836 = vmatprep.subr.mxu0 %v835
    %v837 = vand.u32 %v447, 4294901760
    %v838 = vsub.f32 %v447, %v837
    %839 = vmatpush1.msra.mxu0 %v838
    %v840 = vand.u32 %v450, 4294901760
    %v841 = vsub.f32 %v450, %v840
    %842 = vmatprep.subr.mxu0 %v841
    %v843 = vand.u32 %v449, 4294901760
    %v844 = vsub.f32 %v449, %v843
    %845 = vmatpush1.msra.mxu0 %v844
    %v846 = vand.u32 %v452, 4294901760
    %v847 = vsub.f32 %v452, %v846
    %848 = vmatprep.subr.mxu0 %v847
    %v849 = vand.u32 %v451, 4294901760
    %v850 = vsub.f32 %v451, %v849
    %851 = vmatpush1.msra.mxu0 %v850
    %v852 = vand.u32 %v454, 4294901760
    %v853 = vsub.f32 %v454, %v852
    %854 = vmatprep.subr.mxu0 %v853
    %v855 = vand.u32 %v453, 4294901760
    %v856 = vsub.f32 %v453, %v855
    %857 = vmatpush1.msra.mxu0 %v856
    %v858 = vand.u32 %v456, 4294901760
    %v859 = vsub.f32 %v456, %v858
    %860 = vmatprep.subr.mxu0 %v859
    %v861 = vand.u32 %v455, 4294901760
    %v862 = vsub.f32 %v455, %v861
    %863 = vmatpush1.msra.mxu0 %v862
    %v864 = vand.u32 %v458, 4294901760
    %v865 = vsub.f32 %v458, %v864
    %866 = vmatprep.subr.mxu0 %v865
    %v867 = vand.u32 %v457, 4294901760
    %v868 = vsub.f32 %v457, %v867
    %869 = vmatpush1.msra.mxu0 %v868
    %v870 = vand.u32 %v460, 4294901760
    %v871 = vsub.f32 %v460, %v870
    %872 = vmatprep.subr.mxu0 %v871
    %v873 = vand.u32 %v459, 4294901760
    %v874 = vsub.f32 %v459, %v873
    %875 = vmatpush1.msra.mxu0 %v874
    %v876 = vand.u32 %v462, 4294901760
    %v877 = vsub.f32 %v462, %v876
    %878 = vmatprep.subr.mxu0 %v877
    %v879 = vand.u32 %v461, 4294901760
    %v880 = vsub.f32 %v461, %v879
    %881 = vmatpush1.msra.mxu0 %v880
    %v882 = vand.u32 %v464, 4294901760
    %v883 = vsub.f32 %v464, %v882
    %884 = vmatprep.subr.mxu0 %v883
    %v885 = vand.u32 %v463, 4294901760
    %v886 = vsub.f32 %v463, %v885
    %887 = vmatpush1.msra.mxu0 %v886
    %v888 = vand.u32 %v466, 4294901760
    %v889 = vsub.f32 %v466, %v888
    %890 = vmatprep.subr.mxu0 %v889
    %v891 = vand.u32 %v465, 4294901760
    %v892 = vsub.f32 %v465, %v891
    %893 = vmatpush1.msra.mxu0 %v892
    %v894 = vand.u32 %v468, 4294901760
    %v895 = vsub.f32 %v468, %v894
    %896 = vmatprep.subr.mxu0 %v895
    %v897 = vand.u32 %v467, 4294901760
    %v898 = vsub.f32 %v467, %v897
    %899 = vmatpush1.msra.mxu0 %v898
    %v900 = vand.u32 %v470, 4294901760
    %v901 = vsub.f32 %v470, %v900
    %902 = vmatprep.subr.mxu0 %v901
    %v903 = vand.u32 %v469, 4294901760
    %v904 = vsub.f32 %v469, %v903
    %905 = vmatpush1.msra.mxu0 %v904
    %v906 = vand.u32 %v472, 4294901760
    %v907 = vsub.f32 %v472, %v906
    %908 = vmatprep.subr.mxu0 %v907
    %v909 = vand.u32 %v471, 4294901760
    %v910 = vsub.f32 %v471, %v909
    %911 = vmatpush1.msra.mxu0 %v910
    %v912 = vand.u32 %v474, 4294901760
    %v913 = vsub.f32 %v474, %v912
    %914 = vmatprep.subr.mxu0 %v913
    %v915 = vand.u32 %v473, 4294901760
    %v916 = vsub.f32 %v473, %v915
    %917 = vmatpush1.msra.mxu0 %v916
    %918 = vmatprep.subr.mxu0 0.0
    %919 = vmatpush1.msra.mxu0 0.0
    %920 = vmatprep.subr.mxu0 0.0
    %921 = vmatpush1.msra.mxu0 0.0
    %922 = vmatprep.subr.mxu0 0.0
    %923 = vmatpush1.msra.mxu0 0.0
    %924 = vmatprep.subr.mxu0 0.0
    %925 = vmatpush1.msra.mxu0 0.0
    %926 = vmatprep.subr.mxu0 0.0
    %927 = vmatpush1.msra.mxu0 0.0
    %928 = vmatprep.subr.mxu0 0.0
    %929 = vmatpush1.msra.mxu0 0.0
    %930 = vmatprep.subr.mxu0 0.0
    %931 = vmatpush1.msra.mxu0 0.0
    %932 = vmatprep.subr.mxu0 0.0
    %933 = vmatpush1.msra.mxu0 0.0
    %934 = vmatprep.subr.mxu0 0.0
    %935 = vmatpush1.msra.mxu0 0.0
    %936 = vmatprep.subr.mxu0 0.0
    %937 = vmatpush1.msra.mxu0 0.0
    %938 = vmatprep.subr.mxu0 0.0
    %939 = vmatpush1.msra.mxu0 0.0
    %940 = vmatprep.subr.mxu0 0.0
    %941 = vmatpush1.msra.mxu0 0.0
    %942 = vmatprep.subr.mxu0 0.0
    %943 = vmatpush1.msra.mxu0 0.0
    %944 = vmatprep.subr.mxu0 0.0
    %945 = vmatpush1.msra.mxu0 0.0
    %946 = vmatprep.subr.mxu0 0.0
    %947 = vmatpush1.msra.mxu0 0.0
    %948 = vmatprep.subr.mxu0 0.0
    %949 = vmatpush1.msra.mxu0 0.0
    %950 = vmatprep.mubr.f32.mxu0 0.0
    %v951 = vand.u32 %v475, 4294901760
    %v952 = vsub.f32 %v475, %v951
    %953 = vmatmul.mubr.f32.gmra.mrb[0].mxu0 %v952
    %v954 = vpop.f32.mrb[0].mxu0
    %v955 = vadd.f32 %v818, %v954
    %v956 = vpop.f32.mrb[0].mxu0
    %v957 = vadd.f32 %v820, %v956
    %958 = vdwg.mxu0
    %v959 = vand.u32 %v444, 4294901760
    %960 = vmatprep.subr.mxu0 %v959
    %v961 = vand.u32 %v443, 4294901760
    %962 = vmatpush1.msra.mxu0 %v961
    %v963 = vand.u32 %v446, 4294901760
    %964 = vmatprep.subr.mxu0 %v963
    %v965 = vand.u32 %v445, 4294901760
    %966 = vmatpush1.msra.mxu0 %v965
    %v967 = vand.u32 %v448, 4294901760
    %968 = vmatprep.subr.mxu0 %v967
    %v969 = vand.u32 %v447, 4294901760
    %970 = vmatpush1.msra.mxu0 %v969
    %v971 = vand.u32 %v450, 4294901760
    %972 = vmatprep.subr.mxu0 %v971
    %v973 = vand.u32 %v449, 4294901760
    %974 = vmatpush1.msra.mxu0 %v973
    %v975 = vand.u32 %v452, 4294901760
    %976 = vmatprep.subr.mxu0 %v975
    %v977 = vand.u32 %v451, 4294901760
    %978 = vmatpush1.msra.mxu0 %v977
    %v979 = vand.u32 %v454, 4294901760
    %980 = vmatprep.subr.mxu0 %v979
    %v981 = vand.u32 %v453, 4294901760
    %982 = vmatpush1.msra.mxu0 %v981
    %v983 = vand.u32 %v456, 4294901760
    %984 = vmatprep.subr.mxu0 %v983
    %v985 = vand.u32 %v455, 4294901760
    %986 = vmatpush1.msra.mxu0 %v985
    %v987 = vand.u32 %v458, 4294901760
    %988 = vmatprep.subr.mxu0 %v987
    %v989 = vand.u32 %v457, 4294901760
    %990 = vmatpush1.msra.mxu0 %v989
    %v991 = vand.u32 %v460, 4294901760
    %992 = vmatprep.subr.mxu0 %v991
    %v993 = vand.u32 %v459, 4294901760
    %994 = vmatpush1.msra.mxu0 %v993
    %v995 = vand.u32 %v462, 4294901760
    %996 = vmatprep.subr.mxu0 %v995
    %v997 = vand.u32 %v461, 4294901760
    %998 = vmatpush1.msra.mxu0 %v997
    %v999 = vand.u32 %v464, 4294901760
    %1000 = vmatprep.subr.mxu0 %v999
    %v1001 = vand.u32 %v463, 4294901760
    %1002 = vmatpush1.msra.mxu0 %v1001
    %v1003 = vand.u32 %v466, 4294901760
    %1004 = vmatprep.subr.mxu0 %v1003
    %v1005 = vand.u32 %v465, 4294901760
    %1006 = vmatpush1.msra.mxu0 %v1005
    %v1007 = vand.u32 %v468, 4294901760
    %1008 = vmatprep.subr.mxu0 %v1007
    %v1009 = vand.u32 %v467, 4294901760
    %1010 = vmatpush1.msra.mxu0 %v1009
    %v1011 = vand.u32 %v470, 4294901760
    %1012 = vmatprep.subr.mxu0 %v1011
    %v1013 = vand.u32 %v469, 4294901760
    %1014 = vmatpush1.msra.mxu0 %v1013
    %v1015 = vand.u32 %v472, 4294901760
    %1016 = vmatprep.subr.mxu0 %v1015
    %v1017 = vand.u32 %v471, 4294901760
    %1018 = vmatpush1.msra.mxu0 %v1017
    %v1019 = vand.u32 %v474, 4294901760
    %1020 = vmatprep.subr.mxu0 %v1019
    %v1021 = vand.u32 %v473, 4294901760
    %1022 = vmatpush1.msra.mxu0 %v1021
    %1023 = vmatprep.subr.mxu0 0.0
    %1024 = vmatpush1.msra.mxu0 0.0
    %1025 = vmatprep.subr.mxu0 0.0
    %1026 = vmatpush1.msra.mxu0 0.0
    %1027 = vmatprep.subr.mxu0 0.0
    %1028 = vmatpush1.msra.mxu0 0.0
    %1029 = vmatprep.subr.mxu0 0.0
    %1030 = vmatpush1.msra.mxu0 0.0
    %1031 = vmatprep.subr.mxu0 0.0
    %1032 = vmatpush1.msra.mxu0 0.0
    %1033 = vmatprep.subr.mxu0 0.0
    %1034 = vmatpush1.msra.mxu0 0.0
    %1035 = vmatprep.subr.mxu0 0.0
    %1036 = vmatpush1.msra.mxu0 0.0
    %1037 = vmatprep.subr.mxu0 0.0
    %1038 = vmatpush1.msra.mxu0 0.0
    %1039 = vmatprep.subr.mxu0 0.0
    %1040 = vmatpush1.msra.mxu0 0.0
    %1041 = vmatprep.subr.mxu0 0.0
    %1042 = vmatpush1.msra.mxu0 0.0
    %1043 = vmatprep.subr.mxu0 0.0
    %1044 = vmatpush1.msra.mxu0 0.0
    %1045 = vmatprep.subr.mxu0 0.0
    %1046 = vmatpush1.msra.mxu0 0.0
    %1047 = vmatprep.subr.mxu0 0.0
    %1048 = vmatpush1.msra.mxu0 0.0
    %1049 = vmatprep.subr.mxu0 0.0
    %1050 = vmatpush1.msra.mxu0 0.0
    %1051 = vmatprep.subr.mxu0 0.0
    %1052 = vmatpush1.msra.mxu0 0.0
    %1053 = vmatprep.subr.mxu0 0.0
    %1054 = vmatpush1.msra.mxu0 0.0
    %1055 = vmatprep.mubr.f32.mxu0 0.0
    %v1056 = vand.u32 %v475, 4294901760
    %v1057 = vsub.f32 %v475, %v1056
    %v1058 = vand.u32 %v1057, 4294901760
    %1059 = vmatmul.mubr.f32.gmra.mrb[0].mxu0 %v1058
    %v1060 = vpop.f32.mrb[0].mxu0
    %v1061 = vadd.f32 %v955, %v1060
    %v1062 = vpop.f32.mrb[0].mxu0
    %v1063 = vadd.f32 %v957, %v1062
    %1064 = vdwg.mxu0
    %v1065 = vand.u32 %v444, 4294901760
    %v1066 = vsub.f32 %v444, %v1065
    %v1067 = vand.u32 %v1066, 4294901760
    %1068 = vmatprep.subr.mxu0 %v1067
    %v1069 = vand.u32 %v443, 4294901760
    %v1070 = vsub.f32 %v443, %v1069
    %v1071 = vand.u32 %v1070, 4294901760
    %1072 = vmatpush1.msra.mxu0 %v1071
    %v1073 = vand.u32 %v446, 4294901760
    %v1074 = vsub.f32 %v446, %v1073
    %v1075 = vand.u32 %v1074, 4294901760
    %1076 = vmatprep.subr.mxu0 %v1075
    %v1077 = vand.u32 %v445, 4294901760
    %v1078 = vsub.f32 %v445, %v1077
    %v1079 = vand.u32 %v1078, 4294901760
    %1080 = vmatpush1.msra.mxu0 %v1079
    %v1081 = vand.u32 %v448, 4294901760
    %v1082 = vsub.f32 %v448, %v1081
    %v1083 = vand.u32 %v1082, 4294901760
    %1084 = vmatprep.subr.mxu0 %v1083
    %v1085 = vand.u32 %v447, 4294901760
    %v1086 = vsub.f32 %v447, %v1085
    %v1087 = vand.u32 %v1086, 4294901760
    %1088 = vmatpush1.msra.mxu0 %v1087
    %v1089 = vand.u32 %v450, 4294901760
    %v1090 = vsub.f32 %v450, %v1089
    %v1091 = vand.u32 %v1090, 4294901760
    %1092 = vmatprep.subr.mxu0 %v1091
    %v1093 = vand.u32 %v449, 4294901760
    %v1094 = vsub.f32 %v449, %v1093
    %v1095 = vand.u32 %v1094, 4294901760
    %1096 = vmatpush1.msra.mxu0 %v1095
    %v1097 = vand.u32 %v452, 4294901760
    %v1098 = vsub.f32 %v452, %v1097
    %v1099 = vand.u32 %v1098, 4294901760
    %1100 = vmatprep.subr.mxu0 %v1099
    %v1101 = vand.u32 %v451, 4294901760
    %v1102 = vsub.f32 %v451, %v1101
    %v1103 = vand.u32 %v1102, 4294901760
    %1104 = vmatpush1.msra.mxu0 %v1103
    %v1105 = vand.u32 %v454, 4294901760
    %v1106 = vsub.f32 %v454, %v1105
    %v1107 = vand.u32 %v1106, 4294901760
    %1108 = vmatprep.subr.mxu0 %v1107
    %v1109 = vand.u32 %v453, 4294901760
    %v1110 = vsub.f32 %v453, %v1109
    %v1111 = vand.u32 %v1110, 4294901760
    %1112 = vmatpush1.msra.mxu0 %v1111
    %v1113 = vand.u32 %v456, 4294901760
    %v1114 = vsub.f32 %v456, %v1113
    %v1115 = vand.u32 %v1114, 4294901760
    %1116 = vmatprep.subr.mxu0 %v1115
    %v1117 = vand.u32 %v455, 4294901760
    %v1118 = vsub.f32 %v455, %v1117
    %v1119 = vand.u32 %v1118, 4294901760
    %1120 = vmatpush1.msra.mxu0 %v1119
    %v1121 = vand.u32 %v458, 4294901760
    %v1122 = vsub.f32 %v458, %v1121
    %v1123 = vand.u32 %v1122, 4294901760
    %1124 = vmatprep.subr.mxu0 %v1123
    %v1125 = vand.u32 %v457, 4294901760
    %v1126 = vsub.f32 %v457, %v1125
    %v1127 = vand.u32 %v1126, 4294901760
    %1128 = vmatpush1.msra.mxu0 %v1127
    %v1129 = vand.u32 %v460, 4294901760
    %v1130 = vsub.f32 %v460, %v1129
    %v1131 = vand.u32 %v1130, 4294901760
    %1132 = vmatprep.subr.mxu0 %v1131
    %v1133 = vand.u32 %v459, 4294901760
    %v1134 = vsub.f32 %v459, %v1133
    %v1135 = vand.u32 %v1134, 4294901760
    %1136 = vmatpush1.msra.mxu0 %v1135
    %v1137 = vand.u32 %v462, 4294901760
    %v1138 = vsub.f32 %v462, %v1137
    %v1139 = vand.u32 %v1138, 4294901760
    %1140 = vmatprep.subr.mxu0 %v1139
    %v1141 = vand.u32 %v461, 4294901760
    %v1142 = vsub.f32 %v461, %v1141
    %v1143 = vand.u32 %v1142, 4294901760
    %1144 = vmatpush1.msra.mxu0 %v1143
    %v1145 = vand.u32 %v464, 4294901760
    %v1146 = vsub.f32 %v464, %v1145
    %v1147 = vand.u32 %v1146, 4294901760
    %1148 = vmatprep.subr.mxu0 %v1147
    %v1149 = vand.u32 %v463, 4294901760
    %v1150 = vsub.f32 %v463, %v1149
    %v1151 = vand.u32 %v1150, 4294901760
    %1152 = vmatpush1.msra.mxu0 %v1151
    %v1153 = vand.u32 %v466, 4294901760
    %v1154 = vsub.f32 %v466, %v1153
    %v1155 = vand.u32 %v1154, 4294901760
    %1156 = vmatprep.subr.mxu0 %v1155
    %v1157 = vand.u32 %v465, 4294901760
    %v1158 = vsub.f32 %v465, %v1157
    %v1159 = vand.u32 %v1158, 4294901760
    %1160 = vmatpush1.msra.mxu0 %v1159
    %v1161 = vand.u32 %v468, 4294901760
    %v1162 = vsub.f32 %v468, %v1161
    %v1163 = vand.u32 %v1162, 4294901760
    %1164 = vmatprep.subr.mxu0 %v1163
    %v1165 = vand.u32 %v467, 4294901760
    %v1166 = vsub.f32 %v467, %v1165
    %v1167 = vand.u32 %v1166, 4294901760
    %1168 = vmatpush1.msra.mxu0 %v1167
    %v1169 = vand.u32 %v470, 4294901760
    %v1170 = vsub.f32 %v470, %v1169
    %v1171 = vand.u32 %v1170, 4294901760
    %1172 = vmatprep.subr.mxu0 %v1171
    %v1173 = vand.u32 %v469, 4294901760
    %v1174 = vsub.f32 %v469, %v1173
    %v1175 = vand.u32 %v1174, 4294901760
    %1176 = vmatpush1.msra.mxu0 %v1175
    %v1177 = vand.u32 %v472, 4294901760
    %v1178 = vsub.f32 %v472, %v1177
    %v1179 = vand.u32 %v1178, 4294901760
    %1180 = vmatprep.subr.mxu0 %v1179
    %v1181 = vand.u32 %v471, 4294901760
    %v1182 = vsub.f32 %v471, %v1181
    %v1183 = vand.u32 %v1182, 4294901760
    %1184 = vmatpush1.msra.mxu0 %v1183
    %v1185 = vand.u32 %v474, 4294901760
    %v1186 = vsub.f32 %v474, %v1185
    %v1187 = vand.u32 %v1186, 4294901760
    %1188 = vmatprep.subr.mxu0 %v1187
    %v1189 = vand.u32 %v473, 4294901760
    %v1190 = vsub.f32 %v473, %v1189
    %v1191 = vand.u32 %v1190, 4294901760
    %1192 = vmatpush1.msra.mxu0 %v1191
    %1193 = vmatprep.subr.mxu0 0.0
    %1194 = vmatpush1.msra.mxu0 0.0
    %1195 = vmatprep.subr.mxu0 0.0
    %1196 = vmatpush1.msra.mxu0 0.0
    %1197 = vmatprep.subr.mxu0 0.0
    %1198 = vmatpush1.msra.mxu0 0.0
    %1199 = vmatprep.subr.mxu0 0.0
    %1200 = vmatpush1.msra.mxu0 0.0
    %1201 = vmatprep.subr.mxu0 0.0
    %1202 = vmatpush1.msra.mxu0 0.0
    %1203 = vmatprep.subr.mxu0 0.0
    %1204 = vmatpush1.msra.mxu0 0.0
    %1205 = vmatprep.subr.mxu0 0.0
    %1206 = vmatpush1.msra.mxu0 0.0
    %1207 = vmatprep.subr.mxu0 0.0
    %1208 = vmatpush1.msra.mxu0 0.0
    %1209 = vmatprep.subr.mxu0 0.0
    %1210 = vmatpush1.msra.mxu0 0.0
    %1211 = vmatprep.subr.mxu0 0.0
    %1212 = vmatpush1.msra.mxu0 0.0
    %1213 = vmatprep.subr.mxu0 0.0
    %1214 = vmatpush1.msra.mxu0 0.0
    %1215 = vmatprep.subr.mxu0 0.0
    %1216 = vmatpush1.msra.mxu0 0.0
    %1217 = vmatprep.subr.mxu0 0.0
    %1218 = vmatpush1.msra.mxu0 0.0
    %1219 = vmatprep.subr.mxu0 0.0
    %1220 = vmatpush1.msra.mxu0 0.0
    %1221 = vmatprep.subr.mxu0 0.0
    %1222 = vmatpush1.msra.mxu0 0.0
    %1223 = vmatprep.subr.mxu0 0.0
    %1224 = vmatpush1.msra.mxu0 0.0
    %1225 = vmatprep.mubr.f32.mxu0 0.0
    %v1226 = vand.u32 %v475, 4294901760
    %1227 = vmatmul.mubr.f32.gmra.mrb[0].mxu0 %v1226
    %v1228 = vpop.f32.mrb[0].mxu0
    %v1229 = vadd.f32 %v1061, %v1228
    %v1230 = vpop.f32.mrb[0].mxu0
    %v1231 = vadd.f32 %v1063, %v1230
    %1232 = vdwg.mxu0
    %v1233 = vand.u32 %v444, 4294901760
    %1234 = vmatprep.subr.mxu0 %v1233
    %v1235 = vand.u32 %v443, 4294901760
    %1236 = vmatpush1.msra.mxu0 %v1235
    %v1237 = vand.u32 %v446, 4294901760
    %1238 = vmatprep.subr.mxu0 %v1237
    %v1239 = vand.u32 %v445, 4294901760
    %1240 = vmatpush1.msra.mxu0 %v1239
    %v1241 = vand.u32 %v448, 4294901760
    %1242 = vmatprep.subr.mxu0 %v1241
    %v1243 = vand.u32 %v447, 4294901760
    %1244 = vmatpush1.msra.mxu0 %v1243
    %v1245 = vand.u32 %v450, 4294901760
    %1246 = vmatprep.subr.mxu0 %v1245
    %v1247 = vand.u32 %v449, 4294901760
    %1248 = vmatpush1.msra.mxu0 %v1247
    %v1249 = vand.u32 %v452, 4294901760
    %1250 = vmatprep.subr.mxu0 %v1249
    %v1251 = vand.u32 %v451, 4294901760
    %1252 = vmatpush1.msra.mxu0 %v1251
    %v1253 = vand.u32 %v454, 4294901760
    %1254 = vmatprep.subr.mxu0 %v1253
    %v1255 = vand.u32 %v453, 4294901760
    %1256 = vmatpush1.msra.mxu0 %v1255
    %v1257 = vand.u32 %v456, 4294901760
    %1258 = vmatprep.subr.mxu0 %v1257
    %v1259 = vand.u32 %v455, 4294901760
    %1260 = vmatpush1.msra.mxu0 %v1259
    %v1261 = vand.u32 %v458, 4294901760
    %1262 = vmatprep.subr.mxu0 %v1261
    %v1263 = vand.u32 %v457, 4294901760
    %1264 = vmatpush1.msra.mxu0 %v1263
    %v1265 = vand.u32 %v460, 4294901760
    %1266 = vmatprep.subr.mxu0 %v1265
    %v1267 = vand.u32 %v459, 4294901760
    %1268 = vmatpush1.msra.mxu0 %v1267
    %v1269 = vand.u32 %v462, 4294901760
    %1270 = vmatprep.subr.mxu0 %v1269
    %v1271 = vand.u32 %v461, 4294901760
    %1272 = vmatpush1.msra.mxu0 %v1271
    %v1273 = vand.u32 %v464, 4294901760
    %1274 = vmatprep.subr.mxu0 %v1273
    %v1275 = vand.u32 %v463, 4294901760
    %1276 = vmatpush1.msra.mxu0 %v1275
    %v1277 = vand.u32 %v466, 4294901760
    %1278 = vmatprep.subr.mxu0 %v1277
    %v1279 = vand.u32 %v465, 4294901760
    %1280 = vmatpush1.msra.mxu0 %v1279
    %v1281 = vand.u32 %v468, 4294901760
    %1282 = vmatprep.subr.mxu0 %v1281
    %v1283 = vand.u32 %v467, 4294901760
    %1284 = vmatpush1.msra.mxu0 %v1283
    %v1285 = vand.u32 %v470, 4294901760
    %1286 = vmatprep.subr.mxu0 %v1285
    %v1287 = vand.u32 %v469, 4294901760
    %1288 = vmatpush1.msra.mxu0 %v1287
    %v1289 = vand.u32 %v472, 4294901760
    %1290 = vmatprep.subr.mxu0 %v1289
    %v1291 = vand.u32 %v471, 4294901760
    %1292 = vmatpush1.msra.mxu0 %v1291
    %v1293 = vand.u32 %v474, 4294901760
    %1294 = vmatprep.subr.mxu0 %v1293
    %v1295 = vand.u32 %v473, 4294901760
    %1296 = vmatpush1.msra.mxu0 %v1295
    %1297 = vmatprep.subr.mxu0 0.0
    %1298 = vmatpush1.msra.mxu0 0.0
    %1299 = vmatprep.subr.mxu0 0.0
    %1300 = vmatpush1.msra.mxu0 0.0
    %1301 = vmatprep.subr.mxu0 0.0
    %1302 = vmatpush1.msra.mxu0 0.0
    %1303 = vmatprep.subr.mxu0 0.0
    %1304 = vmatpush1.msra.mxu0 0.0
    %1305 = vmatprep.subr.mxu0 0.0
    %1306 = vmatpush1.msra.mxu0 0.0
    %1307 = vmatprep.subr.mxu0 0.0
    %1308 = vmatpush1.msra.mxu0 0.0
    %1309 = vmatprep.subr.mxu0 0.0
    %1310 = vmatpush1.msra.mxu0 0.0
    %1311 = vmatprep.subr.mxu0 0.0
    %1312 = vmatpush1.msra.mxu0 0.0
    %1313 = vmatprep.subr.mxu0 0.0
    %1314 = vmatpush1.msra.mxu0 0.0
    %1315 = vmatprep.subr.mxu0 0.0
    %1316 = vmatpush1.msra.mxu0 0.0
    %1317 = vmatprep.subr.mxu0 0.0
    %1318 = vmatpush1.msra.mxu0 0.0
    %1319 = vmatprep.subr.mxu0 0.0
    %1320 = vmatpush1.msra.mxu0 0.0
    %1321 = vmatprep.subr.mxu0 0.0
    %1322 = vmatpush1.msra.mxu0 0.0
    %1323 = vmatprep.subr.mxu0 0.0
    %1324 = vmatpush1.msra.mxu0 0.0
    %1325 = vmatprep.subr.mxu0 0.0
    %1326 = vmatpush1.msra.mxu0 0.0
    %1327 = vmatprep.subr.mxu0 0.0
    %1328 = vmatpush1.msra.mxu0 0.0
    %1329 = vmatprep.mubr.f32.mxu0 0.0
    %v1330 = vand.u32 %v475, 4294901760
    %1331 = vmatmul.mubr.f32.gmra.mrb[0].mxu0 %v1330
    %v1332 = vpop.f32.mrb[0].mxu0
    %v1333 = vadd.f32 %v1229, %v1332
    %v1334 = vpop.f32.mrb[0].mxu0
    %v1335 = vadd.f32 %v1231, %v1334
    %1336 = vdwg.mxu0
    %v1339 = vrot.slane %v1333, 1
    %v1340 = vrot.slane %v1335, 1
    %v1343 = vmax.f32 %v1333, %v1339
    %v1344 = vmax.f32 %v1335, %v1340
    %v1345 = vrot.slane %v1333, 2
    %v1346 = vrot.slane %v1335, 2
    %v1349 = vmax.f32 %v1343, %v1345
    %v1350 = vmax.f32 %v1344, %v1346
    %v1351 = vsub.f32 %v1333, %v1349
    %v1352 = vsub.f32 %v1335, %v1350
    %v1353 = vmul.f32 %v1351, 1.442695
    %v1354 = vpow.pop %v1353
    %v1355 = vmul.f32 %v1352, 1.442695
    %v1356 = vpow.pop %v1355
    %v1359 = vrot.slane %v1349, 7
    %v1360 = vrot.slane %v1350, 7
    %v1363 = vsub.f32 %v1333, %v1359
    %v1364 = vsub.f32 %v1335, %v1360
    %v1365 = vmul.f32 %v1363, 1.442695
    %v1366 = vpow.pop %v1365
    %v1367 = vmul.f32 %v1364, 1.442695
    %v1368 = vpow.pop %v1367
    %v1371 = vrot.slane %v1366, 1
    %v1372 = vrot.slane %v1368, 1
    %v1375 = vadd.f32 %v1354, %v1371
    %v1376 = vadd.f32 %v1356, %v1372
    %v1377 = vrot.slane %v1349, 6
    %v1378 = vrot.slane %v1350, 6
    %v1381 = vsub.f32 %v1333, %v1377
    %v1382 = vsub.f32 %v1335, %v1378
    %v1383 = vmul.f32 %v1381, 1.442695
    %v1384 = vpow.pop %v1383
    %v1385 = vmul.f32 %v1382, 1.442695
    %v1386 = vpow.pop %v1385
    %v1389 = vrot.slane %v1384, 2
    %v1390 = vrot.slane %v1386, 2
    %v1393 = vadd.f32 %v1375, %v1389
    %v1394 = vadd.f32 %v1376, %v1390
    %v1395 = vlog2.pop %v1393
    %v1396 = vmul.f32 %v1395, 0.6931472
    %v1397 = vlog2.pop %v1394
    %v1398 = vmul.f32 %v1397, 0.6931472
    %v1399 = vadd.f32 %v1349, %v1396
    %v1400 = vadd.f32 %v1350, %v1398
    %v1401 = vlaneseq
    %v1402 = vshrl.u32 %v1401, 7
    %v1403 = vsub.s32 0, %v1402
    %v1404 = vrot.slane %v1399, %v1403
    %v1405 = vlaneseq
    %v1406 = vshrl.u32 %v1405, 7
    %v1407 = vsub.s32 0, %v1406
    %v1408 = vrot.slane %v1400, %v1407
    %v1409 = vsub.f32 %v1333, %v1404
    %v1410 = vsub.f32 %v1335, %v1408
    %v1413 = vcombine.low %v1409, %v1410
    %1415 = vst [vmem:[#allocation2] sm:$0x77] %v1413
    // Predicated region
    $region22: #{tpu_custom_call.1} parent=1 // pred_check
      _
    $region23: #{tpu_custom_call.1} parent=1 // pred_check_branch
      %1417 = sbr.rel (0) target = $region25
    $region24: #{tpu_custom_call.1} parent=1 // pred_region
      %s1419 = ssub.s32 128, 128
      %1420 = vsyncadd [#allocation3], %s1419
      %s1422 = sshll.u32 [#allocation2], 4
      %s1423 = int_to_ptr.vmem [resolvable:$true] %s1422
      %1425 = dma.vmem_to_hbm [thread:$0]  %s1423, 128, %s5, [#allocation3]
    $region25: #{tpu_custom_call.1} parent=1 // pred_fallthru
      _
    // Predicated region
    $region26: #{tpu_custom_call.1} parent=1 // pred_check
      _
    $region27: #{tpu_custom_call.1} parent=1 // pred_check_branch
      %1427 = sbr.rel (0) target = $region29
    $region28: #{tpu_custom_call.1} parent=1 // pred_region
      %1428 = dma.done [#allocation3], 128
    $region29: #{tpu_custom_call.1} parent=1 // pred_fallthru
      _
    %1429 = vsyncpa [#allocation3], 1

</llo_original>
